<compile_context>
chip_gen: v5e
topology: v5e:2x2
jax: 0.10.0
libtpu: 0.0.40
codegen_flags: <defaults>
</compile_context>

<pallas_src>
import math

import jax
import jax.numpy as jnp
from jax.experimental import pallas as pl
from jax.experimental.pallas import tpu as pltpu

HIDDEN_SIZES = [20, 20]
_LANE = 128


def _round_up(n: int, m: int) -> int:
    return ((n + m - 1) // m) * m


# ----------------------------------------------------------------------------
# Kernel: transposed 3-matmul MLP (biases + dueling combine pre-folded)
# ----------------------------------------------------------------------------
def _mlp3_kernel(x_ref, w1_ref, w2_ref, wh_ref, out_ref):
    """out = Wh @ relu(W2 @ relu(W1 @ x)), everything feature-major (lane dim = batch).

    x_ref  : (P,  TB)  param_dtype, row P-1 is the constant 1.0 "bias" row
    w1_ref : (F1, P)   layer-1 weights^T (+ bias column, + ones passthrough)
    w2_ref : (F2, F1)  layer-2 weights^T (+ bias column, + ones passthrough)
    wh_ref : (FA, F2)  folded dueling head^T (+ bias column)
    out_ref: (FA, TB)  f32, rows beyond the true action_size are zero/ignored
    """
    wdt = w1_ref.dtype
    x = x_ref[...]
    h1 = jnp.dot(w1_ref[...], x, preferred_element_type=jnp.float32)
    h1 = jnp.maximum(h1, 0.0)
    h2 = jnp.dot(w2_ref[...], h1.astype(wdt), preferred_element_type=jnp.float32)
    h2 = jnp.maximum(h2, 0.0)
    q = jnp.dot(wh_ref[...], h2.astype(wdt), preferred_element_type=jnp.float32)
    out_ref[...] = q.astype(out_ref.dtype)


# ----------------------------------------------------------------------------
# Host-side packing (do this ONCE per parameter update, not per forward call)
# ----------------------------------------------------------------------------
def _net_dims(params):
    S, H1 = params["w1"].shape
    H2 = params["w2"].shape[1]
    A = params["wa"].shape[1]
    return S, H1, H2, A


def _fold_head(params):
    """Fold V + A - mean(A) into a single (H2, A) weight / (A,) bias (f32)."""
    wv, wa = params["wv"], params["wa"]            # (H2, A)
    bv, ba = params["bv"][0], params["ba"][0]      # (A,)
    wcomb = wv + wa - jnp.mean(wa, axis=1, keepdims=True)
    bcomb = bv + ba - jnp.mean(ba)
    return wcomb, bcomb


def _pack_single_blocks(params, P, Ap, param_dtype):
    """Transposed, zero-padded, homogeneous-coordinate weight blocks for one network."""
    S, H1, H2, A = _net_dims(params)
    one = P - 1                                    # index of the constant-1 row

    W1p = jnp.zeros((P, P), jnp.float32)
    W1p = W1p.at[0:H1, 0:S].set(params["w1"].T)
    W1p = W1p.at[0:H1, one].set(params["b1"][0])
    W1p = W1p.at[one, one].set(1.0)                # relu(1)=1 -> ones row survives

    W2p = jnp.zeros((P, P), jnp.float32)
    W2p = W2p.at[0:H2, 0:H1].set(params["w2"].T)
    W2p = W2p.at[0:H2, one].set(params["b2"][0])
    W2p = W2p.at[one, one].set(1.0)

    wcomb, bcomb = _fold_head(params)              # fold in f32, cast once at the end
    Whp = jnp.zeros((Ap, P), jnp.float32)
    Whp = Whp.at[0:A, 0:H2].set(wcomb.T)
    Whp = Whp.at[0:A, one].set(bcomb)

    return (W1p.astype(param_dtype), W2p.astype(param_dtype), Whp.astype(param_dtype))


def _padded_dims(S, H1, H2, A, param_dtype):
    itemsize = jnp.dtype(param_dtype).itemsize
    sub = 8 if itemsize >= 4 else (16 if itemsize == 2 else 32)
    P = _round_up(max(S, H1, H2) + 1, sub)         # +1 reserves the constant-1 row
    Ap = _round_up(A, sub)
    return P, Ap


def pack_params(params, param_dtype=jnp.float32):
    """Pack one network. Returns an opaque `packed` object for *_packed forwards."""
    S, H1, H2, A = _net_dims(params)
    P, Ap = _padded_dims(S, H1, H2, A, param_dtype)
    weights = _pack_single_blocks(params, P, Ap, param_dtype)
    meta = dict(S=S, A=A, P=P, Ap=Ap, out_rows=Ap, dtype=param_dtype)
    return weights, meta


def pack_params_pair(params_local, params_target, param_dtype=jnp.float32):
    """Pack local+target as ONE fused network: stacked layer-1, block-diag layers 2/3."""
    dims_l, dims_t = _net_dims(params_local), _net_dims(params_target)
    assert dims_l == dims_t, "local/target networks must have identical shapes"
    S, H1, H2, A = dims_l
    P, Ap = _padded_dims(S, H1, H2, A, param_dtype)

    W1l, W2l, Whl = _pack_single_blocks(params_local, P, Ap, param_dtype)
    W1t, W2t, Wht = _pack_single_blocks(params_target, P, Ap, param_dtype)

    W1pair = jnp.concatenate([W1l, W1t], axis=0)                       # (2P, P)
    W2pair = jnp.zeros((2 * P, 2 * P), param_dtype)
    W2pair = W2pair.at[0:P, 0:P].set(W2l).at[P:2 * P, P:2 * P].set(W2t)
    Whpair = jnp.zeros((2 * Ap, 2 * P), param_dtype)
    Whpair = Whpair.at[0:Ap, 0:P].set(Whl).at[Ap:2 * Ap, P:2 * P].set(Wht)

    meta = dict(S=S, A=A, P=P, Ap=Ap, out_rows=2 * Ap, dtype=param_dtype)
    return (W1pair, W2pair, Whpair), meta


# ----------------------------------------------------------------------------
# Wrappers
# ----------------------------------------------------------------------------
def _grid_setup(B, batch_tile):
    """Lane-aligned batch tiling; aims for >= 2 grid steps when B > 128 (v7x: 2 TCs)."""
    cap = max(_LANE, (int(batch_tile) // _LANE) * _LANE)
    n_lane = -(-B // _LANE)                        # B in 128-row blocks
    if n_lane >= 2:
        TB = min(cap, ((n_lane + 1) // 2) * _LANE)
    else:
        TB = _LANE
    B_pad = -(-(n_lane * _LANE) // TB) * TB
    return TB, B_pad, B_pad // TB


def _prep_xt(state, meta, B_pad):
    """(B, S) batch-major state -> (P, B_pad) feature-major block with a ones row.
    NOTE: callers doing large replay-buffer sweeps should store states feature-major
    to skip this wrapper-side transpose; at DQN batch sizes it is negligible."""
    B, S = state.shape
    assert S == meta["S"], "state feature dim does not match packed params"
    P, dtype = meta["P"], meta["dtype"]
    xt = jnp.zeros((P, B_pad), dtype)
    xt = xt.at[0:S, 0:B].set(state.T.astype(dtype))
    xt = xt.at[P - 1, :].set(jnp.ones((B_pad,), dtype))     # homogeneous bias row
    return xt


def _forward_packed_raw(state, packed, batch_tile):
    weights, meta = packed
    W1, W2, Wh = weights
    B = state.shape[0]
    TB, B_pad, nb = _grid_setup(B, batch_tile)
    xt = _prep_xt(state, meta, B_pad)
    P, out_rows = meta["P"], meta["out_rows"]

    out = pl.pallas_call(
        _mlp3_kernel,
        out_shape=jax.ShapeDtypeStruct((out_rows, B_pad), jnp.float32),
        grid_spec=pltpu.PrefetchScalarGridSpec(
            num_scalar_prefetch=0,
            grid=(nb,),
            in_specs=[
                pl.BlockSpec((P, TB), lambda i: (0, i)),     # x streamed, lane-dense
                pl.BlockSpec(W1.shape, lambda i: (0, 0)),    # weights: VMEM-resident
                pl.BlockSpec(W2.shape, lambda i: (0, 0)),
                pl.BlockSpec(Wh.shape, lambda i: (0, 0)),
            ],
            out_specs=pl.BlockSpec((out_rows, TB), lambda i: (0, i)),  # lane-dense store
        ),
        compiler_params=pltpu.CompilerParams(
            # Batch tiles are independent -> v7x shards them across its 2 TensorCores.
            # Footprint (<~2 MiB at TB=2048) is far below even v5e's 16 MiB scoped VMEM,
            # so no vmem_limit_bytes override is needed.
            dimension_semantics=("parallel",)),
    )(xt, W1, W2, Wh)
    return out, meta, B


def dueling_q_forward_packed(state, packed, *, batch_tile=2048):
    """state: (B, state_size). Returns (B, action_size) f32 Q-values."""
    out, meta, B = _forward_packed_raw(state, packed, batch_tile)
    return out[0:meta["A"], 0:B].T


def dueling_q_forward(state, params, *, param_dtype=jnp.float32, batch_tile=2048):
    """Convenience entry point (packs every call — cache pack_params() in hot loops)."""
    return dueling_q_forward_packed(state, pack_params(params, param_dtype),
                                    batch_tile=batch_tile)


def dueling_q_forward_pair_packed(state, packed_pair, *, batch_tile=2048):
    """Fused local+target evaluation: one x stream, 3 matmuls total, one output buffer."""
    out, meta, B = _forward_packed_raw(state, packed_pair, batch_tile)
    A, Ap = meta["A"], meta["Ap"]
    return out[0:A, 0:B].T, out[Ap:Ap + A, 0:B].T


def dueling_q_forward_pair(state, params_local, params_target, *,
                           param_dtype=jnp.float32, batch_tile=2048):
    packed = pack_params_pair(params_local, params_target, param_dtype)
    return dueling_q_forward_pair_packed(state, packed, batch_tile=batch_tile)


# TODO(synk): a DQN-update-specific variant could scalar-prefetch action indices and emit
# Q_local(s,a) / max_a Q_target(s') directly, but that exceeds the module's forward spec.


# ----------------------------------------------------------------------------
# Init (mimics nn.Linear default) and pure-JAX reference
# ----------------------------------------------------------------------------
def init_linear(key, fan_in, fan_out):
    bound = 1.0 / math.sqrt(fan_in)
    kw, kb = jax.random.split(key)
    w = jax.random.uniform(kw, (fan_in, fan_out), jnp.float32, -bound, bound)
    b = jax.random.uniform(kb, (1, fan_out), jnp.float32, -bound, bound)
    return w, b


def make_params(key, state_size, action_size):
    k1, k2, k3, k4 = jax.random.split(key, 4)
    w1, b1 = init_linear(k1, state_size, HIDDEN_SIZES[0])
    w2, b2 = init_linear(k2, HIDDEN_SIZES[0], HIDDEN_SIZES[1])
    wv, bv = init_linear(k3, HIDDEN_SIZES[1], action_size)
    wa, ba = init_linear(k4, HIDDEN_SIZES[1], action_size)
    return dict(w1=w1, b1=b1, w2=w2, b2=b2, wv=wv, bv=bv, wa=wa, ba=ba)


def reference_forward(state, p):
    h1 = jax.nn.relu(state @ p["w1"] + p["b1"])
    h2 = jax.nn.relu(h1 @ p["w2"] + p["b2"])
    v = h2 @ p["wv"] + p["bv"]
    a = h2 @ p["wa"] + p["ba"]
    return v + a - jnp.mean(a, axis=1, keepdims=True)


# ----------------------------------------------------------------------------
# Self-test
# ----------------------------------------------------------------------------
if __name__ == "__main__":
    key = jax.random.PRNGKey(0)
    k_params, k_params_t, k_state, k_big = jax.random.split(key, 4)

    batch, state_size, action_size = 8, 16, 4
    params = make_params(k_params, state_size, action_size)
    params_t = make_params(k_params_t, state_size, action_size)
    state = jax.random.normal(k_state, (batch, state_size), jnp.float32)
    ref = reference_forward(state, params)
    ref_t = reference_forward(state, params_t)

    # 1) f32 path vs. pure-JAX reference (head fold changes only f32 rounding order).
    out = jax.block_until_ready(dueling_q_forward(state, params))
    assert out.shape == (batch, action_size)
    assert jnp.allclose(out, ref, atol=1e-4, rtol=1e-4), "f32 kernel mismatch vs reference"

    # 2) Fused local + target (single launch, 3 matmuls, shared x stream).
    out_l, out_t = jax.block_until_ready(dueling_q_forward_pair(state, params, params_t))
    assert jnp.allclose(out_l, ref, atol=1e-4, rtol=1e-4), "pair kernel (local) mismatch"
    assert jnp.allclose(out_t, ref_t, atol=1e-4, rtol=1e-4), "pair kernel (target) mismatch"

    # 3) Pre-packed path + batch grid with B not divisible by the tile (padding + >=2 tiles).
    big_state = jax.random.normal(k_big, (300, state_size), jnp.float32)
    packed = pack_params(params)
    out_big = jax.block_until_ready(
        dueling_q_forward_packed(big_state, packed, batch_tile=128))
    assert out_big.shape == (300, action_size)
    assert jnp.allclose(out_big, reference_forward(big_state, params),
                        atol=1e-4, rtol=1e-4), "batched kernel mismatch vs reference"

    # 4) bf16 parameter/stream path (v6e/v7x-friendly); f32 accumulation, loose tolerance.
    out_bf = jax.block_until_ready(
        dueling_q_forward(state, params, param_dtype=jnp.bfloat16))
    assert jnp.allclose(out_bf, ref, atol=5e-2, rtol=5e-2), "bf16 kernel drifted too far"

    print("KERNEL_OK")
</pallas_src>

<mosaic_0001>
module attributes {stable_mosaic.version = 11 : i64} {
  func.func @_mlp3_kernel(%arg0: i32, %arg1: memref<24x128xf32, #tpu.memory_space<vmem>>, %arg2: memref<24x24xf32, #tpu.memory_space<vmem>>, %arg3: memref<24x24xf32, #tpu.memory_space<vmem>>, %arg4: memref<8x24xf32, #tpu.memory_space<vmem>>, %arg5: memref<8x128xf32, #tpu.memory_space<vmem>>) attributes {dimension_semantics = [#tpu.dimension_semantics<parallel>], iteration_bounds = array<i64: 1>, scalar_prefetch = 0 : i64, scratch_operands = 0 : i64, tpu.core_type = #tpu.core_type<tc>, window_params = [{transform_indices = @transform_0, window_bounds = array<i64: 24, 128>}, {pipeline_mode = #tpu.pipeline_mode<synchronous>, transform_indices = @transform_1, window_bounds = array<i64: 24, 24>}, {pipeline_mode = #tpu.pipeline_mode<synchronous>, transform_indices = @transform_2, window_bounds = array<i64: 24, 24>}, {pipeline_mode = #tpu.pipeline_mode<synchronous>, transform_indices = @transform_3, window_bounds = array<i64: 8, 24>}, {transform_indices = @transform_4, window_bounds = array<i64: 8, 128>}]} {
    %c0 = arith.constant 0 : index
    %c0_0 = arith.constant 0 : index
    %0 = vector.load %arg1[%c0, %c0_0] : memref<24x128xf32, #tpu.memory_space<vmem>>, vector<24x128xf32>
    %c0_1 = arith.constant 0 : index
    %c0_2 = arith.constant 0 : index
    %1 = vector.load %arg2[%c0_1, %c0_2] : memref<24x24xf32, #tpu.memory_space<vmem>>, vector<24x24xf32>
    %cst = arith.constant dense<0.000000e+00> : vector<24x128xf32>
    %2 = tpu.matmul %1, %0, %cst {dimension_numbers = #tpu.dot_dimension_numbers<[1], [0], [0], [1], [0, 0, 1, 1], [], []>} : vector<24x24xf32>, vector<24x128xf32>, vector<24x128xf32> -> vector<24x128xf32>
    %cst_3 = arith.constant 0.000000e+00 : f32
    %3 = vector.broadcast %cst_3 : f32 to vector<24x128xf32>
    %4 = arith.maximumf %2, %3 : vector<24x128xf32>
    %c0_4 = arith.constant 0 : index
    %c0_5 = arith.constant 0 : index
    %5 = vector.load %arg3[%c0_4, %c0_5] : memref<24x24xf32, #tpu.memory_space<vmem>>, vector<24x24xf32>
    %cst_6 = arith.constant dense<0.000000e+00> : vector<24x128xf32>
    %6 = tpu.matmul %5, %4, %cst_6 {dimension_numbers = #tpu.dot_dimension_numbers<[1], [0], [0], [1], [0, 0, 1, 1], [], []>} : vector<24x24xf32>, vector<24x128xf32>, vector<24x128xf32> -> vector<24x128xf32>
    %cst_7 = arith.constant 0.000000e+00 : f32
    %7 = vector.broadcast %cst_7 : f32 to vector<24x128xf32>
    %8 = arith.maximumf %6, %7 : vector<24x128xf32>
    %c0_8 = arith.constant 0 : index
    %c0_9 = arith.constant 0 : index
    %9 = vector.load %arg4[%c0_8, %c0_9] : memref<8x24xf32, #tpu.memory_space<vmem>>, vector<8x24xf32>
    %cst_10 = arith.constant dense<0.000000e+00> : vector<8x128xf32>
    %10 = tpu.matmul %9, %8, %cst_10 {dimension_numbers = #tpu.dot_dimension_numbers<[1], [0], [0], [1], [0, 0, 1, 1], [], []>} : vector<8x24xf32>, vector<24x128xf32>, vector<8x128xf32> -> vector<8x128xf32>
    %c0_11 = arith.constant 0 : index
    %c0_12 = arith.constant 0 : index
    %11 = vector.load %arg5[%c0_11, %c0_12] : memref<8x128xf32, #tpu.memory_space<vmem>>, vector<8x128xf32>
    tpu.vector_store %arg5[%c0_11, %c0_12], %10 {strides = array<i32>} : memref<8x128xf32, #tpu.memory_space<vmem>>, vector<8x128xf32>,
    return
  }
  func.func @transform_0(%arg0: i32) -> (i32, i32) {
    %c0_i32 = arith.constant 0 : i32
    %c0_i32_0 = arith.constant 0 : i32
    return %c0_i32, %arg0 : i32, i32
  }
  func.func @transform_1(%arg0: i32) -> (i32, i32) {
    %c0_i32 = arith.constant 0 : i32
    %c0_i32_0 = arith.constant 0 : i32
    %c0_i32_1 = arith.constant 0 : i32
    return %c0_i32, %c0_i32_0 : i32, i32
  }
  func.func @transform_2(%arg0: i32) -> (i32, i32) {
    %c0_i32 = arith.constant 0 : i32
    %c0_i32_0 = arith.constant 0 : i32
    %c0_i32_1 = arith.constant 0 : i32
    return %c0_i32, %c0_i32_0 : i32, i32
  }
  func.func @transform_3(%arg0: i32) -> (i32, i32) {
    %c0_i32 = arith.constant 0 : i32
    %c0_i32_0 = arith.constant 0 : i32
    %c0_i32_1 = arith.constant 0 : i32
    return %c0_i32, %c0_i32_0 : i32, i32
  }
  func.func @transform_4(%arg0: i32) -> (i32, i32) {
    %c0_i32 = arith.constant 0 : i32
    %c0_i32_0 = arith.constant 0 : i32
    return %c0_i32, %arg0 : i32, i32
  }
}

</mosaic_0001>

<llo_original>
// kernel: tpu_custom_call.1
$region0: #{tpu_custom_call.1}
  #allocation0 [shape = 'u32[]', space=smem, size = 0x4, offset = 0x4, fixed_abs, tag = 'smem constant byte address 0x4 - core index']
  #allocation1 [shape = 'u32[72,128]{1,0:T(1,128)}', space=vmem, size = 0x9000, scoped, tag = 'internal scratch']
  %s0 = inlined_call_operand.hbm [shape: f32[24,128], index: 0, kind: input, shape index: {}]
  %s1 = inlined_call_operand.hbm [shape: f32[24,24], index: 1, kind: input, shape index: {}]
  %s2 = inlined_call_operand.hbm [shape: f32[24,24], index: 2, kind: input, shape index: {}]
  %s3 = inlined_call_operand.hbm [shape: f32[8,24], index: 3, kind: input, shape index: {}]
  %s4 = inlined_call_operand.hbm [shape: f32[8,128], index: 4, kind: output, shape index: {}]
  %s5 = sld [smem:[#allocation0]]
  $region42: #{tpu_custom_call.1} parent=0
    _
  %s7 = ssub.s32 1, %s5
  %s8 = scalar_select 0, %s7, %s5
  $region1: #{tpu_custom_call.1} parent=0
    #allocation2 [shape = 'u8[12288]{0}', space=vmem, size = 0x3000, scoped, tag = 'input window, operand 0, single buffered']
    #allocation3 [shape = 's32[1]{0}', space=sflag, size = 0x4, scoped, tag = 'scoped memory for tpu_custom_call.1']
    #allocation4 [shape = 's32[1]{0}', space=sflag, size = 0x4, scoped, tag = 'scoped memory for tpu_custom_call.1']
    #allocation5 [shape = 'u8[12288]{0}', space=vmem, size = 0x3000, scoped, tag = 'input window, operand 1, single buffered']
    #allocation6 [shape = 's32[1]{0}', space=sflag, size = 0x4, scoped, tag = 'scoped memory for tpu_custom_call.1']
    #allocation7 [shape = 'u8[12288]{0}', space=vmem, size = 0x3000, scoped, tag = 'input window, operand 2, single buffered']
    #allocation8 [shape = 'u8[4096]{0}', space=vmem, size = 0x1000, scoped, tag = 'input window, operand 3, single buffered']
    #allocation9 [shape = 's32[1]{0}', space=sflag, size = 0x4, scoped, tag = 'scoped memory for tpu_custom_call.1']
    #allocation10 [shape = 'u8[4096]{0}', space=vmem, size = 0x1000, scoped, tag = 'output window, operand 0, single buffered']
    %9 = vsyncpa [#allocation3], 0
    %10 = vsyncpa [#allocation6], 0
    %11 = vsyncpa [#allocation9], 0
    %12 = vsyncpa [#allocation4], 0
    // Predicated region
    $region2: #{tpu_custom_call.1} parent=1 // pred_check
      _
    $region3: #{tpu_custom_call.1} parent=1 // pred_check_branch
      %14 = sbr.rel (0) target = $region5
    $region4: #{tpu_custom_call.1} parent=1 // pred_region
      %16 = vsyncadd [#allocation3], 0
      %s17 = sshll.u32 %s0, 4
      %s18 = int_to_ptr.hbm [resolvable:$true] %s17
      %s19 = sshll.u32 [#allocation2], 4
      %s20 = int_to_ptr.vmem [resolvable:$true] %s19
      %25 = dma.hbm_to_vmem [thread:$0]  %s18, 384, %s20, [#allocation3], 128, 128, 8
    $region5: #{tpu_custom_call.1} parent=1 // pred_fallthru
      _
    // Predicated region
    $region6: #{tpu_custom_call.1} parent=1 // pred_check
      _
    $region7: #{tpu_custom_call.1} parent=1 // pred_check_branch
      %27 = sbr.rel (0) target = $region9
    $region8: #{tpu_custom_call.1} parent=1 // pred_region
      %29 = vsyncadd [#allocation6], 0
      %s30 = sshll.u32 %s1, 4
      %s31 = int_to_ptr.hbm [resolvable:$true] %s30
      %s32 = sshll.u32 [#allocation5], 4
      %s33 = int_to_ptr.vmem [resolvable:$true] %s32
      %38 = dma.hbm_to_vmem [thread:$0]  %s31, 384, %s33, [#allocation6], 128, 128, 8
    $region9: #{tpu_custom_call.1} parent=1 // pred_fallthru
      _
    // Predicated region
    $region10: #{tpu_custom_call.1} parent=1 // pred_check
      _
    $region11: #{tpu_custom_call.1} parent=1 // pred_check_branch
      %40 = sbr.rel (0) target = $region13
    $region12: #{tpu_custom_call.1} parent=1 // pred_region
      %42 = vsyncadd [#allocation6], 0
      %s43 = sshll.u32 %s2, 4
      %s44 = int_to_ptr.hbm [resolvable:$true] %s43
      %s45 = sshll.u32 [#allocation7], 4
      %s46 = int_to_ptr.vmem [resolvable:$true] %s45
      %51 = dma.hbm_to_vmem [thread:$0]  %s44, 384, %s46, [#allocation6], 128, 128, 8
    $region13: #{tpu_custom_call.1} parent=1 // pred_fallthru
      _
    // Predicated region
    $region14: #{tpu_custom_call.1} parent=1 // pred_check
      _
    $region15: #{tpu_custom_call.1} parent=1 // pred_check_branch
      %53 = sbr.rel (0) target = $region17
    $region16: #{tpu_custom_call.1} parent=1 // pred_region
      %55 = vsyncadd [#allocation9], 0
      %s57 = sshll.u32 %s3, 4
      %s58 = int_to_ptr.hbm [resolvable:$true] %s57
      %s59 = sshll.u32 [#allocation8], 4
      %s60 = int_to_ptr.vmem [resolvable:$true] %s59
      %62 = dma.hbm_to_vmem [thread:$0]  %s58, 128, %s60, [#allocation9]
    $region17: #{tpu_custom_call.1} parent=1 // pred_fallthru
      _
    // Predicated region
    $region18: #{tpu_custom_call.1} parent=1 // pred_check
      _
    $region19: #{tpu_custom_call.1} parent=1 // pred_check_branch
      %64 = sbr.rel (0) target = $region21
    $region20: #{tpu_custom_call.1} parent=1 // pred_region
      %66 = dma.done [#allocation3], 384
    $region21: #{tpu_custom_call.1} parent=1 // pred_fallthru
      _
    // Predicated region
    $region22: #{tpu_custom_call.1} parent=1 // pred_check
      _
    $region23: #{tpu_custom_call.1} parent=1 // pred_check_branch
      %68 = sbr.rel (0) target = $region25
    $region24: #{tpu_custom_call.1} parent=1 // pred_region
      %70 = dma.done [#allocation6], 384
    $region25: #{tpu_custom_call.1} parent=1 // pred_fallthru
      _
    // Predicated region
    $region26: #{tpu_custom_call.1} parent=1 // pred_check
      _
    $region27: #{tpu_custom_call.1} parent=1 // pred_check_branch
      %72 = sbr.rel (0) target = $region29
    $region28: #{tpu_custom_call.1} parent=1 // pred_region
      %74 = dma.done [#allocation6], 384
    $region29: #{tpu_custom_call.1} parent=1 // pred_fallthru
      _
    // Predicated region
    $region30: #{tpu_custom_call.1} parent=1 // pred_check
      _
    $region31: #{tpu_custom_call.1} parent=1 // pred_check_branch
      %76 = sbr.rel (0) target = $region33
    $region32: #{tpu_custom_call.1} parent=1 // pred_region
      %78 = dma.done [#allocation9], 128
    $region33: #{tpu_custom_call.1} parent=1 // pred_fallthru
      _
    %v79 = vld [vmem:[#allocation2] sm:$0xff]
    %v80 = vld [vmem:[#allocation2 + $0x8] sm:$0xff]
    %v81 = vld [vmem:[#allocation2 + $0x10] sm:$0xff]
    %v82 = vld [vmem:[#allocation5] sm:$0xff]
    %v83 = vld [vmem:[#allocation5 + $0x8] sm:$0xff]
    %v84 = vld [vmem:[#allocation5 + $0x10] sm:$0xff]
    %vm85 = vcmask 195584
    %v87 = vsel %vm85, %v82, 0
    %v90 = vsel %vm85, %v83, 0
    %v93 = vsel %vm85, %v84, 0
    %95 = vmatpush.msra.mxu0 0.0
    %96 = vmatpush.msra.mxu0 0.0
    %97 = vmatpush.msra.mxu0 0.0
    %98 = vmatpush.msra.mxu0 0.0
    %99 = vmatpush.msra.mxu0 0.0
    %100 = vmatpush.msra.mxu0 0.0
    %101 = vmatpush.msra.mxu0 0.0
    %102 = vmatpush.msra.mxu0 0.0
    %103 = vmatpush.msra.mxu0 0.0
    %104 = vmatpush.msra.mxu0 0.0
    %105 = vmatpush.msra.mxu0 0.0
    %106 = vmatpush.msra.mxu0 0.0
    %107 = vmatpush.msra.mxu0 0.0
    %108 = vmatpush.msra.mxu0 %v81
    %109 = vmatpush.msra.mxu0 %v80
    %110 = vmatpush.msra.mxu0 %v79
    %111 = vmatmul.f32.gmra.mxu0 %v87
    %v112 = vpop.f32.mrf.mxu0
    %v113 = vadd.f32 0.0, %v112
    %114 = vmatmul.f32.gmra.mxu0 %v90
    %v115 = vpop.f32.mrf.mxu0
    %v116 = vadd.f32 0.0, %v115
    %117 = vmatmul.f32.gmra.mxu0 %v93
    %v118 = vpop.f32.mrf.mxu0
    %v119 = vadd.f32 0.0, %v118
    %120 = vdwg.mxu0
    %v121 = vmax.f32 %v113, 0.0
    %v122 = vmax.f32 %v116, 0.0
    %v123 = vmax.f32 %v119, 0.0
    %v124 = vld [vmem:[#allocation7] sm:$0xff]
    %v125 = vld [vmem:[#allocation7 + $0x8] sm:$0xff]
    %v126 = vld [vmem:[#allocation7 + $0x10] sm:$0xff]
    %v128 = vsel %vm85, %v124, 0
    %v131 = vsel %vm85, %v125, 0
    %v134 = vsel %vm85, %v126, 0
    %136 = vmatpush.msra.mxu0 0.0
    %137 = vmatpush.msra.mxu0 0.0
    %138 = vmatpush.msra.mxu0 0.0
    %139 = vmatpush.msra.mxu0 0.0
    %140 = vmatpush.msra.mxu0 0.0
    %141 = vmatpush.msra.mxu0 0.0
    %142 = vmatpush.msra.mxu0 0.0
    %143 = vmatpush.msra.mxu0 0.0
    %144 = vmatpush.msra.mxu0 0.0
    %145 = vmatpush.msra.mxu0 0.0
    %146 = vmatpush.msra.mxu0 0.0
    %147 = vmatpush.msra.mxu0 0.0
    %148 = vmatpush.msra.mxu0 0.0
    %149 = vmatpush.msra.mxu0 %v123
    %150 = vmatpush.msra.mxu0 %v122
    %151 = vmatpush.msra.mxu0 %v121
    %152 = vmatmul.f32.gmra.mxu0 %v128
    %v153 = vpop.f32.mrf.mxu0
    %v154 = vadd.f32 0.0, %v153
    %155 = vmatmul.f32.gmra.mxu0 %v131
    %v156 = vpop.f32.mrf.mxu0
    %v157 = vadd.f32 0.0, %v156
    %158 = vmatmul.f32.gmra.mxu0 %v134
    %v159 = vpop.f32.mrf.mxu0
    %v160 = vadd.f32 0.0, %v159
    %161 = vdwg.mxu0
    %v162 = vmax.f32 %v154, 0.0
    %v163 = vmax.f32 %v157, 0.0
    %v164 = vmax.f32 %v160, 0.0
    %v165 = vld [vmem:[#allocation8] sm:$0xff]
    %v167 = vsel %vm85, %v165, 0
    %169 = vmatpush.msra.mxu0 0.0
    %170 = vmatpush.msra.mxu0 0.0
    %171 = vmatpush.msra.mxu0 0.0
    %172 = vmatpush.msra.mxu0 0.0
    %173 = vmatpush.msra.mxu0 0.0
    %174 = vmatpush.msra.mxu0 0.0
    %175 = vmatpush.msra.mxu0 0.0
    %176 = vmatpush.msra.mxu0 0.0
    %177 = vmatpush.msra.mxu0 0.0
    %178 = vmatpush.msra.mxu0 0.0
    %179 = vmatpush.msra.mxu0 0.0
    %180 = vmatpush.msra.mxu0 0.0
    %181 = vmatpush.msra.mxu0 0.0
    %182 = vmatpush.msra.mxu0 %v164
    %183 = vmatpush.msra.mxu0 %v163
    %184 = vmatpush.msra.mxu0 %v162
    %185 = vmatmul.f32.gmra.mxu0 %v167
    %v186 = vpop.f32.mrf.mxu0
    %v187 = vadd.f32 0.0, %v186
    %188 = vdwg.mxu0
    %189 = vst [vmem:[#allocation10] sm:$0xff] %v187
    // Predicated region
    $region34: #{tpu_custom_call.1} parent=1 // pred_check
      _
    $region35: #{tpu_custom_call.1} parent=1 // pred_check_branch
      %191 = sbr.rel (0) target = $region37
    $region36: #{tpu_custom_call.1} parent=1 // pred_region
      %193 = vsyncadd [#allocation4], 0
      %s195 = sshll.u32 [#allocation10], 4
      %s196 = int_to_ptr.vmem [resolvable:$true] %s195
      %s197 = sshll.u32 %s4, 4
      %s198 = int_to_ptr.hbm [resolvable:$true] %s197
      %200 = dma.vmem_to_hbm [thread:$0]  %s196, 128, %s198, [#allocation4]
    $region37: #{tpu_custom_call.1} parent=1 // pred_fallthru
      _
    // Predicated region
    $region38: #{tpu_custom_call.1} parent=1 // pred_check
      _
    $region39: #{tpu_custom_call.1} parent=1 // pred_check_branch
      %202 = sbr.rel (0) target = $region41
    $region40: #{tpu_custom_call.1} parent=1 // pred_region
      %204 = dma.done [#allocation4], 128
    $region41: #{tpu_custom_call.1} parent=1 // pred_fallthru
      _
    %205 = vsyncpa [#allocation3], 1
    %206 = vsyncpa [#allocation6], 1
    %207 = vsyncpa [#allocation9], 1
    %208 = vsyncpa [#allocation4], 1

</llo_original>
